<compile_context>
chip_gen: v6e
topology: v6e:2x2x1
jax: 0.10.0
libtpu: 0.0.40
codegen_flags: <defaults>
</compile_context>

<pallas_src>
import jax
import jax.numpy as jnp
from jax.experimental import pallas as pl
from jax.experimental.pallas import tpu as pltpu

H = 110       # true hidden size
H_PAD = 128   # hidden size padded to one full lane group / MXU dim


def _cdiv(a: int, b: int) -> int:
    return -(-a // b)


def _round_up(a: int, b: int) -> int:
    return _cdiv(a, b) * b


def mlp_kernel(xt_ref, w1_ref, w2_ref, ot_ref):
    # xt_ref: (6, TM)      VMEM  -- one lane-dense column tile of x.T
    # w1_ref: (128, 6)     VMEM  -- w1 zero-padded 110 -> 128 rows (resident)
    # w2_ref: (2, 128)     VMEM  -- w2 zero-padded 110 -> 128 cols (resident)
    # ot_ref: (2, TM)      VMEM  -- lane-dense output tile (y.T)
    h = jnp.dot(w1_ref[...], xt_ref[...],
                preferred_element_type=jnp.float32)          # (128, TM)
    # sigmoid(z) = 0.5 * tanh(0.5 * z) + 0.5  -> single EUP push per element.
    h = 0.5 * jnp.tanh(0.5 * h) + 0.5
    # Padded hidden rows are sigmoid(0)=0.5 but hit zero columns of w2 -> exact.
    y = jnp.dot(w2_ref[...], h, preferred_element_type=jnp.float32)  # (2, TM)
    ot_ref[...] = y.astype(ot_ref.dtype)


def net_forward(x, W, *, block_rows: int = 2048):
    """Pallas equivalent of Net(W).forward(x).

    x: (N, 6) float32
    W: (880,) float32 flat parameter vector
    """
    N = x.shape[0]

    # --- parameter glue (mirrors the PyTorch module), pre-padded once ------
    w1 = W[0:660].reshape(H, 6)        # (out=110, in=6)
    w2 = W[660:880].reshape(2, H)      # (out=2,  in=110)
    w1_pad = jnp.zeros((H_PAD, 6), jnp.float32).at[:H, :].set(w1)
    w2_pad = jnp.zeros((2, H_PAD), jnp.float32).at[:, :H].set(w2)

    # --- tile / grid policy --------------------------------------------------
    # grid = cdiv(N, block_rows); pick tm to balance work and minimize the
    # zero-padded tail (< 128 cols per tile).  Force >= 2 grid steps for
    # N > 512 so the "parallel" axis can be split across v7x's two cores.
    grid_n = max(1, _cdiv(N, block_rows))
    if N > 512 and grid_n < 2:
        grid_n = 2
    tm = _round_up(_cdiv(N, grid_n), 128)       # lane-dense tile (mult. of 128)
    n_pad = grid_n * tm

    # Feature-major input: (6, n_pad), zero-padded batch columns (sliced off
    # from the output, so padding is exact).
    xt = jnp.zeros((6, n_pad), jnp.float32).at[:, :N].set(x.T)

    cost = pl.CostEstimate(
        flops=2 * n_pad * (6 * H_PAD + H_PAD * 2),
        transcendentals=n_pad * H_PAD,
        bytes_accessed=(n_pad * 6 + n_pad * 2 + H_PAD * 6 + 2 * H_PAD) * 4,
    )

    out_t = pl.pallas_call(
        mlp_kernel,
        out_shape=jax.ShapeDtypeStruct((2, n_pad), jnp.float32),
        grid_spec=pltpu.PrefetchScalarGridSpec(
            num_scalar_prefetch=0,
            grid=(grid_n,),
            in_specs=[
                pl.BlockSpec((6, tm), lambda i: (0, i)),        # streamed x.T tile
                pl.BlockSpec((H_PAD, 6), lambda i: (0, 0)),     # weights: resident
                pl.BlockSpec((2, H_PAD), lambda i: (0, 0)),     # weights: resident
            ],
            out_specs=pl.BlockSpec((2, tm), lambda i: (0, i)),  # lane-dense output
        ),
        compiler_params=pltpu.CompilerParams(
            dimension_semantics=("parallel",),
        ),
        cost_estimate=cost,
    )(xt, w1_pad, w2_pad)

    # One tiny transpose/slice back to the PyTorch layout.
    return out_t[:, :N].T


def net_forward_ref(x, W):
    """Pure-JAX reference for correctness checking."""
    w1 = W[0:660].reshape(H, 6)
    w2 = W[660:880].reshape(2, H)
    h = jax.nn.sigmoid(x @ w1.T)
    return h @ w2.T


if __name__ == "__main__":
    key = jax.random.PRNGKey(0)
    kx, kw = jax.random.split(key)

    # Deterministic synthetic parameter vector (matches nn.Parameter(W), shape (880,))
    W = jax.random.normal(kw, (880,), dtype=jnp.float32) * 0.1

    # Test 1: multi-tile grid with a ragged tail (N=300, block_rows=128 -> grid=(3,))
    N1 = 300
    x1 = jax.random.normal(kx, (N1, 6), dtype=jnp.float32)
    out1 = jax.block_until_ready(net_forward(x1, W, block_rows=128))
    ref1 = net_forward_ref(x1, W)
    assert out1.shape == (N1, 2), out1.shape
    assert jnp.allclose(out1, ref1, atol=1e-5, rtol=1e-5), (
        f"max abs err = {jnp.max(jnp.abs(out1 - ref1))}"
    )

    # Test 2: tiny batch, single grid step (tm clamps to one 128-wide lane tile)
    N2 = 8
    x2 = jax.random.normal(kx, (N2, 6), dtype=jnp.float32)
    out2 = jax.block_until_ready(net_forward(x2, W))
    ref2 = net_forward_ref(x2, W)
    assert out2.shape == (N2, 2), out2.shape
    assert jnp.allclose(out2, ref2, atol=1e-5, rtol=1e-5), (
        f"max abs err = {jnp.max(jnp.abs(out2 - ref2))}"
    )

    # Test 3: N > 512 -> forced 2-step parallel grid (v7x both-core path)
    N3 = 700
    x3 = jax.random.normal(kx, (N3, 6), dtype=jnp.float32)
    out3 = jax.block_until_ready(net_forward(x3, W))
    ref3 = net_forward_ref(x3, W)
    assert out3.shape == (N3, 2), out3.shape
    assert jnp.allclose(out3, ref3, atol=1e-5, rtol=1e-5), (
        f"max abs err = {jnp.max(jnp.abs(out3 - ref3))}"
    )

    print("KERNEL_OK")
</pallas_src>

<mosaic_0001>
module attributes {stable_mosaic.version = 11 : i64} {
  func.func @mlp_kernel(%arg0: i32, %arg1: memref<6x128xf32, #tpu.memory_space<vmem>>, %arg2: memref<128x6xf32, #tpu.memory_space<vmem>>, %arg3: memref<2x128xf32, #tpu.memory_space<vmem>>, %arg4: memref<2x128xf32, #tpu.memory_space<vmem>>) attributes {dimension_semantics = [#tpu.dimension_semantics<parallel>], iteration_bounds = array<i64: 3>, scalar_prefetch = 0 : i64, scratch_operands = 0 : i64, tpu.core_type = #tpu.core_type<tc>, window_params = [{transform_indices = @transform_0, window_bounds = array<i64: 6, 128>}, {pipeline_mode = #tpu.pipeline_mode<synchronous>, transform_indices = @transform_1, window_bounds = array<i64: 128, 6>}, {pipeline_mode = #tpu.pipeline_mode<synchronous>, transform_indices = @transform_2, window_bounds = array<i64: 2, 128>}, {transform_indices = @transform_3, window_bounds = array<i64: 2, 128>}]} {
    %c0 = arith.constant 0 : index
    %c0_0 = arith.constant 0 : index
    %0 = vector.load %arg2[%c0, %c0_0] : memref<128x6xf32, #tpu.memory_space<vmem>>, vector<128x6xf32>
    %c0_1 = arith.constant 0 : index
    %c0_2 = arith.constant 0 : index
    %1 = vector.load %arg1[%c0_1, %c0_2] : memref<6x128xf32, #tpu.memory_space<vmem>>, vector<6x128xf32>
    %cst = arith.constant dense<0.000000e+00> : vector<128x128xf32>
    %2 = tpu.matmul %0, %1, %cst {dimension_numbers = #tpu.dot_dimension_numbers<[1], [0], [0], [1], [0, 0, 1, 1], [], []>} : vector<128x6xf32>, vector<6x128xf32>, vector<128x128xf32> -> vector<128x128xf32>
    %cst_3 = arith.constant 5.000000e-01 : f32
    %3 = vector.broadcast %cst_3 : f32 to vector<128x128xf32>
    %4 = arith.mulf %3, %2 : vector<128x128xf32>
    %5 = math.tanh %4 : vector<128x128xf32>
    %cst_4 = arith.constant 5.000000e-01 : f32
    %6 = vector.broadcast %cst_4 : f32 to vector<128x128xf32>
    %7 = arith.mulf %6, %5 : vector<128x128xf32>
    %cst_5 = arith.constant 5.000000e-01 : f32
    %8 = vector.broadcast %cst_5 : f32 to vector<128x128xf32>
    %9 = arith.addf %7, %8 : vector<128x128xf32>
    %c0_6 = arith.constant 0 : index
    %c0_7 = arith.constant 0 : index
    %10 = vector.load %arg3[%c0_6, %c0_7] : memref<2x128xf32, #tpu.memory_space<vmem>>, vector<2x128xf32>
    %cst_8 = arith.constant dense<0.000000e+00> : vector<2x128xf32>
    %11 = tpu.matmul %10, %9, %cst_8 {dimension_numbers = #tpu.dot_dimension_numbers<[1], [0], [0], [1], [0, 0, 1, 1], [], []>} : vector<2x128xf32>, vector<128x128xf32>, vector<2x128xf32> -> vector<2x128xf32>
    %c0_9 = arith.constant 0 : index
    %c0_10 = arith.constant 0 : index
    %12 = vector.load %arg4[%c0_9, %c0_10] : memref<2x128xf32, #tpu.memory_space<vmem>>, vector<2x128xf32>
    tpu.vector_store %arg4[%c0_9, %c0_10], %11 {strides = array<i32>} : memref<2x128xf32, #tpu.memory_space<vmem>>, vector<2x128xf32>,
    return
  }
  func.func @transform_0(%arg0: i32) -> (i32, i32) {
    %c0_i32 = arith.constant 0 : i32
    %c0_i32_0 = arith.constant 0 : i32
    return %c0_i32, %arg0 : i32, i32
  }
  func.func @transform_1(%arg0: i32) -> (i32, i32) {
    %c0_i32 = arith.constant 0 : i32
    %c0_i32_0 = arith.constant 0 : i32
    %c0_i32_1 = arith.constant 0 : i32
    return %c0_i32, %c0_i32_0 : i32, i32
  }
  func.func @transform_2(%arg0: i32) -> (i32, i32) {
    %c0_i32 = arith.constant 0 : i32
    %c0_i32_0 = arith.constant 0 : i32
    %c0_i32_1 = arith.constant 0 : i32
    return %c0_i32, %c0_i32_0 : i32, i32
  }
  func.func @transform_3(%arg0: i32) -> (i32, i32) {
    %c0_i32 = arith.constant 0 : i32
    %c0_i32_0 = arith.constant 0 : i32
    return %c0_i32, %arg0 : i32, i32
  }
}

</mosaic_0001>

<llo_original>
// kernel: tpu_custom_call.1
$region0: #{tpu_custom_call.1}
  #allocation0 [shape = 'u32[]', space=smem, size = 0x4, offset = 0x4, fixed_abs, tag = 'smem constant byte address 0x4 - core index']
  #allocation1 [shape = 'u32[144,128]{1,0:T(1,128)}', space=vmem, size = 0x12000, scoped, tag = 'internal scratch']
  %s0 = inlined_call_operand.vmem [shape: f32[6,384], index: 0, kind: input, shape index: {}]
  %s1 = inlined_call_operand.vmem [shape: f32[128,6], index: 1, kind: input, shape index: {}]
  %s2 = inlined_call_operand.vmem [shape: f32[2,128], index: 2, kind: input, shape index: {}]
  %s3 = inlined_call_operand.hbm [shape: f32[2,384], index: 3, kind: output, shape index: {}]
  %s4 = sld [smem:[#allocation0]]
  $region45: #{tpu_custom_call.1} parent=0
    _
  %s6 = ssub.s32 1, %s4
  %s7 = scalar_select 0, %s6, %s4
  $region1: #{tpu_custom_call.1} parent=0
    #allocation2 [shape = 'u8[2048]{0}', space=vmem, size = 0x800, scoped, tag = 'output window, operand 0']
    #allocation3 [shape = 's32[2]{0}', space=sflag, size = 0x8, scoped, tag = 'scoped memory for tpu_custom_call.1']
    %8 = vsyncpa [#allocation3], 0
    %s9 = scalar_lea.sflag [#allocation3], 1
    %10 = vsyncpa %s9, 0
    loop: start=0, step=1, limit=5
    $region2: #{tpu_custom_call.1} parent=1 // loop_pre_header
      _
    $region3: #{tpu_custom_call.1} parent=1 // loop_header
      %s12 = sphi 0, %s16
      %p13 = scmp.ge.s32.totalorder %s12, 5
      %s22 = sphi 0, %s24
      %s25 = sphi 0, %s22
      %s26 = sphi 0, %s25
      %s42 = sphi 0, %s26
      %s46 = sphi 0, %s46
      %s48 = sphi 0, %s46
      %s49 = sphi 0, %s48
      %s63 = sphi 0, %s49
      %s67 = sphi 0, %s67
      %s69 = sphi 0, %s67
      %s70 = sphi 0, %s69
      %s84 = sphi 0, %s70
      %s90 = sphi 0, %s92
      %s93 = sphi 0, %s90
      %s94 = sphi 0, %s93
      %s110 = sphi 0, %s94
    $region4: #{tpu_custom_call.1} parent=1 // loop_header_branch
      %15 = sbr.rel (%p13) target = $region8
    $region5: #{tpu_custom_call.1} parent=1 // loop_body
      %s17 = ssub.s32 %s12, 1
      %s18 = ssub.s32 %s12, 2
      %s19 = sadd.s32 %s12, 1
      %s20 = ssub.s32 %s12, %s19
      %p21 = scmp.eq.s32.totalorder %s20, 0
      %s23 = sadd.s32 %s22, 1
      %s24 = scalar_select %p21, %s22, %s23
      %p27 = pneg %p21
      %p28 = scmp.eq.s32.totalorder %s12, 2
      %p29 = por %p27, %p28
      %p30 = scmp.ne.s32.totalorder %s22, %s25
      %p31 = scmp.eq.s32.totalorder %s12, 0
      %p32 = por %p30, %p31
      %p33 = scmp.ne.s32.totalorder %s22, %s25
      %p34 = scmp.eq.s32.totalorder %s17, 2
      %p35 = por %p33, %p34
      %p36 = scmp.ne.s32.totalorder %s25, %s26
      %p37 = scmp.eq.s32.totalorder %s17, 0
      %p38 = por %p36, %p37
      %p39 = scmp.ne.s32.totalorder %s25, %s26
      %p40 = scmp.eq.s32.totalorder %s18, 2
      %p41 = por %p39, %p40
      %p43 = scmp.ne.s32.totalorder %s26, %s42
      %p44 = scmp.eq.s32.totalorder %s18, 0
      %p45 = por %p43, %p44
      %s47 = sadd.s32 %s46, 1
      %p50 = scmp.eq.s32.totalorder %s12, 2
      %p51 = scmp.ne.s32.totalorder %s46, %s48
      %p52 = scmp.eq.s32.totalorder %s12, 0
      %p53 = por %p51, %p52
      %p54 = scmp.ne.s32.totalorder %s46, %s48
      %p55 = scmp.eq.s32.totalorder %s17, 2
      %p56 = por %p54, %p55
      %p57 = scmp.ne.s32.totalorder %s48, %s49
      %p58 = scmp.eq.s32.totalorder %s17, 0
      %p59 = por %p57, %p58
      %p60 = scmp.ne.s32.totalorder %s48, %s49
      %p61 = scmp.eq.s32.totalorder %s18, 2
      %p62 = por %p60, %p61
      %p64 = scmp.ne.s32.totalorder %s49, %s63
      %p65 = scmp.eq.s32.totalorder %s18, 0
      %p66 = por %p64, %p65
      %s68 = sadd.s32 %s67, 1
      %p71 = scmp.eq.s32.totalorder %s12, 2
      %p72 = scmp.ne.s32.totalorder %s67, %s69
      %p73 = scmp.eq.s32.totalorder %s12, 0
      %p74 = por %p72, %p73
      %p75 = scmp.ne.s32.totalorder %s67, %s69
      %p76 = scmp.eq.s32.totalorder %s17, 2
      %p77 = por %p75, %p76
      %p78 = scmp.ne.s32.totalorder %s69, %s70
      %p79 = scmp.eq.s32.totalorder %s17, 0
      %p80 = por %p78, %p79
      %p81 = scmp.ne.s32.totalorder %s69, %s70
      %p82 = scmp.eq.s32.totalorder %s18, 2
      %p83 = por %p81, %p82
      %p85 = scmp.ne.s32.totalorder %s70, %s84
      %p86 = scmp.eq.s32.totalorder %s18, 0
      %p87 = por %p85, %p86
      %s88 = ssub.s32 %s12, %s19
      %p89 = scmp.eq.s32.totalorder %s88, 0
      %s91 = sadd.s32 %s90, 1
      %s92 = scalar_select %p89, %s90, %s91
      %p95 = pneg %p89
      %p96 = scmp.eq.s32.totalorder %s12, 2
      %p97 = por %p95, %p96
      %p98 = scmp.ne.s32.totalorder %s90, %s93
      %p99 = scmp.eq.s32.totalorder %s12, 0
      %p100 = por %p98, %p99
      %p101 = scmp.ne.s32.totalorder %s90, %s93
      %p102 = scmp.eq.s32.totalorder %s17, 2
      %p103 = por %p101, %p102
      %p104 = scmp.ne.s32.totalorder %s93, %s94
      %p105 = scmp.eq.s32.totalorder %s17, 0
      %p106 = por %p104, %p105
      %p107 = scmp.ne.s32.totalorder %s93, %s94
      %p108 = scmp.eq.s32.totalorder %s18, 2
      %p109 = por %p107, %p108
      %p111 = scmp.ne.s32.totalorder %s94, %s110
      %p112 = scmp.eq.s32.totalorder %s18, 0
      %p113 = por %p111, %p112
      %p114 = scmp.le.s32.totalorder 1, %s12
      %p115 = scmp.lt.s32.totalorder %s12, 4
      %p116 = pnand %p114, %p115
      %p117 = pneg %p116
      // Predicated region
      $region9: #{tpu_custom_call.1} parent=5 // pred_check
        _
      $region10: #{tpu_custom_call.1} parent=5 // pred_check_branch
        %119 = sbr.rel (%p116) target = $region12
      $region11: #{tpu_custom_call.1} parent=5 // pred_region
        %s120 = ssub.s32 %s12, 1
        // Predicated region
        $region13: #{tpu_custom_call.1} parent=11 // pred_check
          %p121 = pneg %p59
        $region14: #{tpu_custom_call.1} parent=11 // pred_check_branch
          %123 = sbr.rel (%p121) target = $region16
        $region15: #{tpu_custom_call.1} parent=11 // pred_region
          _
        $region16: #{tpu_custom_call.1} parent=11 // pred_fallthru
          _
        // Predicated region
        $region17: #{tpu_custom_call.1} parent=11 // pred_check
          %p124 = pneg %p80
        $region18: #{tpu_custom_call.1} parent=11 // pred_check_branch
          %126 = sbr.rel (%p124) target = $region20
        $region19: #{tpu_custom_call.1} parent=11 // pred_region
          _
        $region20: #{tpu_custom_call.1} parent=11 // pred_fallthru
          _
      $region12: #{tpu_custom_call.1} parent=5 // pred_fallthru
        _
      %p127 = scmp.lt.s32.totalorder %s12, 3
      // Predicated region
      $region21: #{tpu_custom_call.1} parent=5 // pred_check
        %p128 = pneg %p127
      $region22: #{tpu_custom_call.1} parent=5 // pred_check_branch
        %130 = sbr.rel (%p128) target = $region24
      $region23: #{tpu_custom_call.1} parent=5 // pred_region
        // Predicated region
        $region25: #{tpu_custom_call.1} parent=23 // pred_check
          %p131 = pneg %p32
        $region26: #{tpu_custom_call.1} parent=23 // pred_check_branch
          %133 = sbr.rel (%p131) target = $region28
        $region27: #{tpu_custom_call.1} parent=23 // pred_region
          %p134 = scmp.lt.s32.totalorder %s12, 2
          %s135 = scalar_select %p134, %s12, 2
          %s136 = smul.addr %s135, 8
          %s137 = scalar_lea.vmem %s0, %s136
        $region28: #{tpu_custom_call.1} parent=23 // pred_fallthru
          _
      $region24: #{tpu_custom_call.1} parent=5 // pred_fallthru
        _
      %p138 = scmp.le.s32.totalorder 1, %s12
      %p139 = scmp.lt.s32.totalorder %s12, 4
      %p140 = pnand %p138, %p139
      %p141 = pneg %p140
      // Predicated region
      $region29: #{tpu_custom_call.1} parent=5 // pred_check
        _
      $region30: #{tpu_custom_call.1} parent=5 // pred_check_branch
        %143 = sbr.rel (%p140) target = $region32
      $region31: #{tpu_custom_call.1} parent=5 // pred_region
        %s144 = ssub.s32 %s12, 1
        %p145 = scmp.lt.s32.totalorder %s17, 2
        %s146 = scalar_select %p145, %s17, 2
        %s147 = smul.addr %s146, 8
        %s148 = scalar_lea.vmem %s0, %s147
        %p149 = pneg %p38
        %p150 = pneg %p35
        %p151 = pneg %p59
        %p152 = pneg %p56
        %p153 = pneg %p80
        %p154 = pneg %p77
        %p155 = pneg %p106
        %p156 = pneg %p103
        %s157 = sand.u32 %s93, 1
        %s158 = scalar_lea.sflag [#allocation3], %s157
        %s159 = sand.u32 %s93, 1
        %s160 = smul.addr %s159, 2
        %s161 = scalar_lea.vmem [#allocation2], %s160
        %p162 = scmp.lt.s32.totalorder %s17, 2
        %s163 = scalar_select %p162, %s17, 2
        %s164 = smul.addr %s163, 8
        %s165 = scalar_lea.vmem %s0, %s164
        %v166 = vld [vmem:[%s1] sm:$0xff]
        %v167 = vld [vmem:[%s1 + $0x8] sm:$0xff]
        %v168 = vld [vmem:[%s1 + $0x10] sm:$0xff]
        %v169 = vld [vmem:[%s1 + $0x18] sm:$0xff]
        %v170 = vld [vmem:[%s1 + $0x20] sm:$0xff]
        %v171 = vld [vmem:[%s1 + $0x28] sm:$0xff]
        %v172 = vld [vmem:[%s1 + $0x30] sm:$0xff]
        %v173 = vld [vmem:[%s1 + $0x38] sm:$0xff]
        %v174 = vld [vmem:[%s1 + $0x40] sm:$0xff]
        %v175 = vld [vmem:[%s1 + $0x48] sm:$0xff]
        %v176 = vld [vmem:[%s1 + $0x50] sm:$0xff]
        %v177 = vld [vmem:[%s1 + $0x58] sm:$0xff]
        %v178 = vld [vmem:[%s1 + $0x60] sm:$0xff]
        %v179 = vld [vmem:[%s1 + $0x68] sm:$0xff]
        %v180 = vld [vmem:[%s1 + $0x70] sm:$0xff]
        %v181 = vld [vmem:[%s1 + $0x78] sm:$0xff]
        %v182 = vld [vmem:[%s165] sm:$0x3f]
        %vm183 = vcmask 48128
        %v185 = vsel %vm183, %v166, 0
        %v188 = vsel %vm183, %v167, 0
        %v191 = vsel %vm183, %v168, 0
        %v194 = vsel %vm183, %v169, 0
        %v197 = vsel %vm183, %v170, 0
        %v200 = vsel %vm183, %v171, 0
        %v203 = vsel %vm183, %v172, 0
        %v206 = vsel %vm183, %v173, 0
        %v209 = vsel %vm183, %v174, 0
        %v212 = vsel %vm183, %v175, 0
        %v215 = vsel %vm183, %v176, 0
        %v218 = vsel %vm183, %v177, 0
        %v221 = vsel %vm183, %v178, 0
        %v224 = vsel %vm183, %v179, 0
        %v227 = vsel %vm183, %v180, 0
        %v230 = vsel %vm183, %v181, 0
        %vm232 = vcmask 1045504
        %v234 = vsel %vm232, %v182, 0
        %236 = vmatprep.subr.mxu0 0.0
        %237 = vmatpush1.msra.mxu0 0.0
        %238 = vmatprep.subr.mxu0 0.0
        %239 = vmatpush1.msra.mxu0 0.0
        %240 = vmatprep.subr.mxu0 0.0
        %241 = vmatpush1.msra.mxu0 0.0
        %242 = vmatprep.subr.mxu0 0.0
        %243 = vmatpush1.msra.mxu0 0.0
        %244 = vmatprep.subr.mxu0 0.0
        %245 = vmatpush1.msra.mxu0 0.0
        %246 = vmatprep.subr.mxu0 0.0
        %247 = vmatpush1.msra.mxu0 0.0
        %248 = vmatprep.subr.mxu0 0.0
        %249 = vmatpush1.msra.mxu0 0.0
        %250 = vmatprep.subr.mxu0 0.0
        %251 = vmatpush1.msra.mxu0 0.0
        %252 = vmatprep.subr.mxu0 0.0
        %253 = vmatpush1.msra.mxu0 0.0
        %254 = vmatprep.subr.mxu0 0.0
        %255 = vmatpush1.msra.mxu0 0.0
        %256 = vmatprep.subr.mxu0 0.0
        %257 = vmatpush1.msra.mxu0 0.0
        %258 = vmatprep.subr.mxu0 0.0
        %259 = vmatpush1.msra.mxu0 0.0
        %260 = vmatprep.subr.mxu0 0.0
        %261 = vmatpush1.msra.mxu0 0.0
        %262 = vmatprep.subr.mxu0 0.0
        %263 = vmatpush1.msra.mxu0 0.0
        %264 = vmatprep.subr.mxu0 0.0
        %265 = vmatpush1.msra.mxu0 0.0
        %266 = vmatprep.subr.mxu0 0.0
        %267 = vmatpush1.msra.mxu0 %v234
        %268 = vmatprep.subr.mxu0 0.0
        %269 = vmatpush2.msra.mxu0 0.0
        %270 = vmatprep.subr.mxu0 0.0
        %271 = vmatpush2.msra.mxu0 0.0
        %272 = vmatprep.subr.mxu0 0.0
        %273 = vmatpush2.msra.mxu0 0.0
        %274 = vmatprep.subr.mxu0 0.0
        %275 = vmatpush2.msra.mxu0 0.0
        %276 = vmatprep.subr.mxu0 0.0
        %277 = vmatpush2.msra.mxu0 0.0
        %278 = vmatprep.subr.mxu0 0.0
        %279 = vmatpush2.msra.mxu0 0.0
        %280 = vmatprep.subr.mxu0 0.0
        %281 = vmatpush2.msra.mxu0 0.0
        %282 = vmatprep.subr.mxu0 0.0
        %283 = vmatpush2.msra.mxu0 0.0
        %284 = vmatprep.subr.mxu0 0.0
        %285 = vmatpush2.msra.mxu0 0.0
        %286 = vmatprep.subr.mxu0 0.0
        %287 = vmatpush2.msra.mxu0 0.0
        %288 = vmatprep.subr.mxu0 0.0
        %289 = vmatpush2.msra.mxu0 0.0
        %290 = vmatprep.subr.mxu0 0.0
        %291 = vmatpush2.msra.mxu0 0.0
        %292 = vmatprep.subr.mxu0 0.0
        %293 = vmatpush2.msra.mxu0 0.0
        %294 = vmatprep.subr.mxu0 0.0
        %295 = vmatpush2.msra.mxu0 0.0
        %296 = vmatprep.subr.mxu0 0.0
        %297 = vmatpush2.msra.mxu0 0.0
        %298 = vmatprep.subr.mxu0 0.0
        %299 = vmatpush2.msra.mxu0 0.0
        %300 = vmatprep.mubr.f32.mxu0 0.0
        %301 = vmatmul.mubr.f32.gmra.mxu0 %v185
        %v302 = vpop.f32.mrf.mxu0
        %v303 = vadd.f32 0.0, %v302
        %v304 = vpop.f32.mrf.mxu0
        %305 = vmatprep.mubr.f32.mxu0 0.0
        %306 = vmatmul.mubr.f32.gmra.mxu0 %v188
        %v307 = vpop.f32.mrf.mxu0
        %v308 = vadd.f32 0.0, %v307
        %v309 = vpop.f32.mrf.mxu0
        %310 = vmatprep.mubr.f32.mxu0 0.0
        %311 = vmatmul.mubr.f32.gmra.mxu0 %v191
        %v312 = vpop.f32.mrf.mxu0
        %v313 = vadd.f32 0.0, %v312
        %v314 = vpop.f32.mrf.mxu0
        %315 = vmatprep.mubr.f32.mxu0 0.0
        %316 = vmatmul.mubr.f32.gmra.mxu0 %v194
        %v317 = vpop.f32.mrf.mxu0
        %v318 = vadd.f32 0.0, %v317
        %v319 = vpop.f32.mrf.mxu0
        %320 = vmatprep.mubr.f32.mxu0 0.0
        %321 = vmatmul.mubr.f32.gmra.mxu0 %v197
        %v322 = vpop.f32.mrf.mxu0
        %v323 = vadd.f32 0.0, %v322
        %v324 = vpop.f32.mrf.mxu0
        %325 = vmatprep.mubr.f32.mxu0 0.0
        %326 = vmatmul.mubr.f32.gmra.mxu0 %v200
        %v327 = vpop.f32.mrf.mxu0
        %v328 = vadd.f32 0.0, %v327
        %v329 = vpop.f32.mrf.mxu0
        %330 = vmatprep.mubr.f32.mxu0 0.0
        %331 = vmatmul.mubr.f32.gmra.mxu0 %v203
        %v332 = vpop.f32.mrf.mxu0
        %v333 = vadd.f32 0.0, %v332
        %v334 = vpop.f32.mrf.mxu0
        %335 = vmatprep.mubr.f32.mxu0 0.0
        %336 = vmatmul.mubr.f32.gmra.mxu0 %v206
        %v337 = vpop.f32.mrf.mxu0
        %v338 = vadd.f32 0.0, %v337
        %v339 = vpop.f32.mrf.mxu0
        %340 = vmatprep.mubr.f32.mxu0 0.0
        %341 = vmatmul.mubr.f32.gmra.mxu0 %v209
        %v342 = vpop.f32.mrf.mxu0
        %v343 = vadd.f32 0.0, %v342
        %v344 = vpop.f32.mrf.mxu0
        %345 = vmatprep.mubr.f32.mxu0 0.0
        %346 = vmatmul.mubr.f32.gmra.mxu0 %v212
        %v347 = vpop.f32.mrf.mxu0
        %v348 = vadd.f32 0.0, %v347
        %v349 = vpop.f32.mrf.mxu0
        %350 = vmatprep.mubr.f32.mxu0 0.0
        %351 = vmatmul.mubr.f32.gmra.mxu0 %v215
        %v352 = vpop.f32.mrf.mxu0
        %v353 = vadd.f32 0.0, %v352
        %v354 = vpop.f32.mrf.mxu0
        %355 = vmatprep.mubr.f32.mxu0 0.0
        %356 = vmatmul.mubr.f32.gmra.mxu0 %v218
        %v357 = vpop.f32.mrf.mxu0
        %v358 = vadd.f32 0.0, %v357
        %v359 = vpop.f32.mrf.mxu0
        %360 = vmatprep.mubr.f32.mxu0 0.0
        %361 = vmatmul.mubr.f32.gmra.mxu0 %v221
        %v362 = vpop.f32.mrf.mxu0
        %v363 = vadd.f32 0.0, %v362
        %v364 = vpop.f32.mrf.mxu0
        %365 = vmatprep.mubr.f32.mxu0 0.0
        %366 = vmatmul.mubr.f32.gmra.mxu0 %v224
        %v367 = vpop.f32.mrf.mxu0
        %v368 = vadd.f32 0.0, %v367
        %v369 = vpop.f32.mrf.mxu0
        %370 = vmatprep.mubr.f32.mxu0 0.0
        %371 = vmatmul.mubr.f32.gmra.mxu0 %v227
        %v372 = vpop.f32.mrf.mxu0
        %v373 = vadd.f32 0.0, %v372
        %v374 = vpop.f32.mrf.mxu0
        %375 = vmatprep.mubr.f32.mxu0 0.0
        %376 = vmatmul.mubr.f32.gmra.mxu0 %v230
        %v377 = vpop.f32.mrf.mxu0
        %v378 = vadd.f32 0.0, %v377
        %v379 = vpop.f32.mrf.mxu0
        %380 = vdwg.mxu0
        %v381 = vmul.f32 %v303, 0.5
        %v382 = vmul.f32 %v308, 0.5
        %v383 = vmul.f32 %v313, 0.5
        %v384 = vmul.f32 %v318, 0.5
        %v385 = vmul.f32 %v323, 0.5
        %v386 = vmul.f32 %v328, 0.5
        %v387 = vmul.f32 %v333, 0.5
        %v388 = vmul.f32 %v338, 0.5
        %v389 = vmul.f32 %v343, 0.5
        %v390 = vmul.f32 %v348, 0.5
        %v391 = vmul.f32 %v353, 0.5
        %v392 = vmul.f32 %v358, 0.5
        %v393 = vmul.f32 %v363, 0.5
        %v394 = vmul.f32 %v368, 0.5
        %v395 = vmul.f32 %v373, 0.5
        %v396 = vmul.f32 %v378, 0.5
        %v397 = vtanh.pop %v381
        %v398 = vtanh.pop %v382
        %v399 = vtanh.pop %v383
        %v400 = vtanh.pop %v384
        %v401 = vtanh.pop %v385
        %v402 = vtanh.pop %v386
        %v403 = vtanh.pop %v387
        %v404 = vtanh.pop %v388
        %v405 = vtanh.pop %v389
        %v406 = vtanh.pop %v390
        %v407 = vtanh.pop %v391
        %v408 = vtanh.pop %v392
        %v409 = vtanh.pop %v393
        %v410 = vtanh.pop %v394
        %v411 = vtanh.pop %v395
        %v412 = vtanh.pop %v396
        %v413 = vmul.f32 %v397, 0.5
        %v414 = vmul.f32 %v398, 0.5
        %v415 = vmul.f32 %v399, 0.5
        %v416 = vmul.f32 %v400, 0.5
        %v417 = vmul.f32 %v401, 0.5
        %v418 = vmul.f32 %v402, 0.5
        %v419 = vmul.f32 %v403, 0.5
        %v420 = vmul.f32 %v404, 0.5
        %v421 = vmul.f32 %v405, 0.5
        %v422 = vmul.f32 %v406, 0.5
        %v423 = vmul.f32 %v407, 0.5
        %v424 = vmul.f32 %v408, 0.5
        %v425 = vmul.f32 %v409, 0.5
        %v426 = vmul.f32 %v410, 0.5
        %v427 = vmul.f32 %v411, 0.5
        %v428 = vmul.f32 %v412, 0.5
        %v429 = vadd.f32 %v413, 0.5
        %v430 = vadd.f32 %v414, 0.5
        %v431 = vadd.f32 %v415, 0.5
        %v432 = vadd.f32 %v416, 0.5
        %v433 = vadd.f32 %v417, 0.5
        %v434 = vadd.f32 %v418, 0.5
        %v435 = vadd.f32 %v419, 0.5
        %v436 = vadd.f32 %v420, 0.5
        %v437 = vadd.f32 %v421, 0.5
        %v438 = vadd.f32 %v422, 0.5
        %v439 = vadd.f32 %v423, 0.5
        %v440 = vadd.f32 %v424, 0.5
        %v441 = vadd.f32 %v425, 0.5
        %v442 = vadd.f32 %v426, 0.5
        %v443 = vadd.f32 %v427, 0.5
        %v444 = vadd.f32 %v428, 0.5
        %v445 = vld [vmem:[%s2] sm:$0x3]
        %446 = vmatprep.subr.mxu0 0.0
        %447 = vmatpush1.msra.mxu0 %v444
        %448 = vmatprep.subr.mxu0 0.0
        %449 = vmatpush1.msra.mxu0 %v443
        %450 = vmatprep.subr.mxu0 0.0
        %451 = vmatpush1.msra.mxu0 %v442
        %452 = vmatprep.subr.mxu0 0.0
        %453 = vmatpush1.msra.mxu0 %v441
        %454 = vmatprep.subr.mxu0 0.0
        %455 = vmatpush1.msra.mxu0 %v440
        %456 = vmatprep.subr.mxu0 0.0
        %457 = vmatpush1.msra.mxu0 %v439
        %458 = vmatprep.subr.mxu0 0.0
        %459 = vmatpush1.msra.mxu0 %v438
        %460 = vmatprep.subr.mxu0 0.0
        %461 = vmatpush1.msra.mxu0 %v437
        %462 = vmatprep.subr.mxu0 0.0
        %463 = vmatpush1.msra.mxu0 %v436
        %464 = vmatprep.subr.mxu0 0.0
        %465 = vmatpush1.msra.mxu0 %v435
        %466 = vmatprep.subr.mxu0 0.0
        %467 = vmatpush1.msra.mxu0 %v434
        %468 = vmatprep.subr.mxu0 0.0
        %469 = vmatpush1.msra.mxu0 %v433
        %470 = vmatprep.subr.mxu0 0.0
        %471 = vmatpush1.msra.mxu0 %v432
        %472 = vmatprep.subr.mxu0 0.0
        %473 = vmatpush1.msra.mxu0 %v431
        %474 = vmatprep.subr.mxu0 0.0
        %475 = vmatpush1.msra.mxu0 %v430
        %476 = vmatprep.subr.mxu0 0.0
        %477 = vmatpush1.msra.mxu0 %v429
        %478 = vmatprep.subr.mxu0 0.0
        %479 = vmatpush2.msra.mxu0 0.0
        %480 = vmatprep.subr.mxu0 0.0
        %481 = vmatpush2.msra.mxu0 0.0
        %482 = vmatprep.subr.mxu0 0.0
        %483 = vmatpush2.msra.mxu0 0.0
        %484 = vmatprep.subr.mxu0 0.0
        %485 = vmatpush2.msra.mxu0 0.0
        %486 = vmatprep.subr.mxu0 0.0
        %487 = vmatpush2.msra.mxu0 0.0
        %488 = vmatprep.subr.mxu0 0.0
        %489 = vmatpush2.msra.mxu0 0.0
        %490 = vmatprep.subr.mxu0 0.0
        %491 = vmatpush2.msra.mxu0 0.0
        %492 = vmatprep.subr.mxu0 0.0
        %493 = vmatpush2.msra.mxu0 0.0
        %494 = vmatprep.subr.mxu0 0.0
        %495 = vmatpush2.msra.mxu0 0.0
        %496 = vmatprep.subr.mxu0 0.0
        %497 = vmatpush2.msra.mxu0 0.0
        %498 = vmatprep.subr.mxu0 0.0
        %499 = vmatpush2.msra.mxu0 0.0
        %500 = vmatprep.subr.mxu0 0.0
        %501 = vmatpush2.msra.mxu0 0.0
        %502 = vmatprep.subr.mxu0 0.0
        %503 = vmatpush2.msra.mxu0 0.0
        %504 = vmatprep.subr.mxu0 0.0
        %505 = vmatpush2.msra.mxu0 0.0
        %506 = vmatprep.subr.mxu0 0.0
        %507 = vmatpush2.msra.mxu0 0.0
        %508 = vmatprep.subr.mxu0 0.0
        %509 = vmatpush2.msra.mxu0 0.0
        %510 = vmatprep.mubr.f32.mxu0 0.0
        %511 = vmatmul.mubr.f32.gmra.mxu0 %v445
        %v512 = vpop.f32.mrf.mxu0
        %v513 = vadd.f32 0.0, %v512
        %v514 = vpop.f32.mrf.mxu0
        %515 = vdwg.mxu0
        %516 = vst [vmem:[%s161] sm:$0x3] %v513
        %s517 = sand.u32 %s93, 1
        %s518 = scalar_lea.sflag [#allocation3], %s517
        %s519 = sand.u32 %s93, 1
        %s520 = smul.addr %s519, 2
        %s521 = scalar_lea.vmem [#allocation2], %s520
        // Predicated region
        $region33: #{tpu_custom_call.1} parent=31 // pred_check
          %p522 = pneg %p103
        $region34: #{tpu_custom_call.1} parent=31 // pred_check_branch
          %524 = sbr.rel (%p522) target = $region36
        $region35: #{tpu_custom_call.1} parent=31 // pred_region
          %s526 = ssub.s32 32, 32
          %527 = vsyncadd %s518, %s526
          %s528 = smul.addr %s17, 32
          %s529 = scalar_lea.hbm %s3, %s528
          %s531 = sshll.u32 %s521, 4
          %s532 = int_to_ptr.vmem [resolvable:$true] %s531
          %534 = dma.vmem_to_hbm [thread:$0]  %s532, 32, %s529, %s518
        $region36: #{tpu_custom_call.1} parent=31 // pred_fallthru
          _
      $region32: #{tpu_custom_call.1} parent=5 // pred_fallthru
        _
      %p535 = scmp.le.s32.totalorder 2, %s12
      // Predicated region
      $region37: #{tpu_custom_call.1} parent=5 // pred_check
        %p536 = pneg %p535
      $region38: #{tpu_custom_call.1} parent=5 // pred_check_branch
        %538 = sbr.rel (%p536) target = $region40
      $region39: #{tpu_custom_call.1} parent=5 // pred_region
        %s539 = ssub.s32 %s12, 2
        // Predicated region
        $region41: #{tpu_custom_call.1} parent=39 // pred_check
          %p540 = pneg %p109
        $region42: #{tpu_custom_call.1} parent=39 // pred_check_branch
          %542 = sbr.rel (%p540) target = $region44
        $region43: #{tpu_custom_call.1} parent=39 // pred_region
          %s543 = sand.u32 %s94, 1
          %s544 = scalar_lea.sflag [#allocation3], %s543
          %s545 = sand.u32 %s94, 1
          %s546 = smul.addr %s545, 2
          %s547 = scalar_lea.vmem [#allocation2], %s546
          %548 = dma.done %s544, 32
        $region44: #{tpu_custom_call.1} parent=39 // pred_fallthru
          _
      $region40: #{tpu_custom_call.1} parent=5 // pred_fallthru
        _
    $region6: #{tpu_custom_call.1} parent=1 // loop_footer
      %s16 = sadd.s32 1, %s12
    $region7: #{tpu_custom_call.1} parent=1 // loop_footer_branch
      %11 = sbr.rel target = $region3
    $region8: #{tpu_custom_call.1} parent=1 // loop_exit
      _
    %549 = vsyncpa [#allocation3], 1
    %s550 = scalar_lea.sflag [#allocation3], 1
    %551 = vsyncpa %s550, 1

</llo_original>
